<compile_context>
chip_gen: v5e
topology: v5e:2x2
jax: 0.10.0
libtpu: 0.0.40
codegen_flags: <defaults>
</compile_context>

<pallas_src>
import functools

import jax
import jax.numpy as jnp
from jax.experimental import pallas as pl
from jax.experimental.pallas import tpu as pltpu


def _round_up(x, m):
    return (x + m - 1) // m * m


def _partial_tile_sum(dist, t, true_b, tile_b):
    """Sum per-row distances of one tile, masking batch-padding rows."""
    if true_b % tile_b == 0:
        return jnp.sum(dist)
    row = t * tile_b + jax.lax.broadcasted_iota(jnp.int32, dist.shape, 0)
    return jnp.sum(jnp.where(row < true_b, dist, 0.0))


def _resident_kernel(lab_ref, x_ref, c_ref, o_ref, *, true_b, tile_b):
    """Fast path: centers fully VMEM-resident; gather rows via one-hot MXU matmul."""
    t = pl.program_id(0)
    x = x_ref[...].astype(jnp.float32)                         # (TB, Dp)
    lab = lab_ref[...]                                          # (TB, 1) int32
    n_cls = c_ref.shape[0]                                      # padded class count
    classes = jax.lax.broadcasted_iota(jnp.int32, (tile_b, n_cls), 1)
    onehot = (lab == classes).astype(jnp.float32)               # exact 0/1 (TB, Cp)
    # Exact row gather: each output element is a single 1.0 * center product,
    # so MXU rounding cannot perturb the result vs. an explicit gather.
    csel = jnp.dot(onehot, c_ref[...].astype(jnp.float32),
                   preferred_element_type=jnp.float32)          # (TB, Dp)
    diff = x - csel
    dist = jnp.clip(jnp.sum(diff * diff, axis=1, keepdims=True), 1e-12, 1e12)
    partial = _partial_tile_sum(dist, t, true_b, tile_b)
    # Lane-dense (1, 128) partial-sum row (avoids a masked 1-lane store).
    o_ref[...] = jnp.full((1, 128), partial, dtype=jnp.float32)


def _pregathered_kernel(x_ref, c_ref, o_ref, *, true_b, tile_b):
    """Slow path: centers[labels] gathered in the wrapper; both operands streamed."""
    t = pl.program_id(0)
    diff = x_ref[...].astype(jnp.float32) - c_ref[...].astype(jnp.float32)
    dist = jnp.clip(jnp.sum(diff * diff, axis=1, keepdims=True), 1e-12, 1e12)
    partial = _partial_tile_sum(dist, t, true_b, tile_b)
    o_ref[...] = jnp.full((1, 128), partial, dtype=jnp.float32)


def center_loss(x, labels, centers, *, tile_b=512):
    """x: (B, D) float, labels: (B,) int, centers: (C, D) float -> f32 scalar."""
    B, D = x.shape
    C, Dc = centers.shape
    assert D == Dc, "feature dims of x and centers must match"

    # Clamp labels to a valid class index (avoids OOB gathers on bad inputs).
    labels = jnp.clip(labels.astype(jnp.int32), 0, C - 1)

    Dp = _round_up(D, 128)                       # lane-pad the feature dim
    x_bytes = jnp.dtype(x.dtype).itemsize
    c_bytes = jnp.dtype(centers.dtype).itemsize

    # Per-core VMEM capacity: gates the resident-centers fast path and sets an
    # explicit scoped-VMEM limit (v5e/v6e: 128 MiB, v7x: 64 MiB per TC).
    try:
        vmem_cap = int(pltpu.get_tpu_info().vmem_capacity_bytes)
    except Exception:
        vmem_cap = 64 << 20                      # conservative (v7x per-TC)

    # --- batch tiling --------------------------------------------------------
    bp8 = _round_up(B, 8)
    tb = min(tile_b, bp8)
    if bp8 >= 16:                                # keep >= 2 grid steps so both
        tb = min(tb, _round_up((bp8 + 1) // 2, 8))   # v7x TensorCores get work
    max_tb = max(8, ((4 << 20) // (Dp * x_bytes)) // 8 * 8)   # ~4 MiB per x buffer
    tb = max(8, min(tb, max_tb))
    bp = _round_up(B, tb)
    nt = bp // tb

    # Zero-padding: padded feature columns contribute 0 to (x - c)^2; padded
    # batch rows are masked out inside the kernel.
    if bp != B or Dp != D:
        x = jnp.pad(x, ((0, bp - B), (0, Dp - D)))
    if bp != B:
        labels = jnp.pad(labels, (0, bp - B))    # pad with class 0 (valid index)

    Cp = _round_up(C, 128)                       # MXU/lane-friendly class padding
    resident_bytes = Cp * Dp * c_bytes
    use_resident = resident_bytes <= vmem_cap // 4

    if use_resident:
        centers_p = centers
        if Cp != C or Dp != D:
            centers_p = jnp.pad(centers, ((0, Cp - C), (0, Dp - D)))
        labels2d = labels.reshape(bp, 1)

        needed = (2 * tb * Dp * x_bytes          # x double buffer
                  + 2 * tb * 4                   # labels double buffer
                  + 2 * resident_bytes           # resident centers (2x to be safe)
                  + 2 * 128 * 4                  # output tile
                  + (2 << 20))                   # headroom / internal scratch
        vmem_limit = min(int(vmem_cap * 0.9), max(needed, 16 << 20))

        grid_spec = pltpu.PrefetchScalarGridSpec(
            num_scalar_prefetch=0,
            grid=(nt,),
            in_specs=[
                pl.BlockSpec((tb, 1), lambda t: (t, 0)),     # labels tile
                pl.BlockSpec((tb, Dp), lambda t: (t, 0)),    # x tile (streamed)
                pl.BlockSpec((Cp, Dp), lambda t: (0, 0)),    # centers: VMEM-resident
            ],
            out_specs=pl.BlockSpec((1, 128), lambda t: (t, 0)),
        )
        partials = pl.pallas_call(
            functools.partial(_resident_kernel, true_b=B, tile_b=tb),
            out_shape=jax.ShapeDtypeStruct((nt, 128), jnp.float32),
            grid_spec=grid_spec,
            compiler_params=pltpu.CompilerParams(
                dimension_semantics=("parallel",),
                vmem_limit_bytes=vmem_limit),
        )(labels2d, x, centers_p)
    else:
        # TODO(synk): add an in-kernel double-buffered HBM row gather with per-tile
        # label dedupe for huge center tables; for now gather once in XLA and
        # stream the selected rows (O(B*D) traffic, no per-row DMA latency).
        c_sel = jnp.take(centers, labels, axis=0)            # (bp, D)
        if Dp != D:
            c_sel = jnp.pad(c_sel, ((0, 0), (0, Dp - D)))

        needed = (2 * tb * Dp * (x_bytes + c_bytes)          # x + gathered buffers
                  + 2 * 128 * 4
                  + (2 << 20))
        vmem_limit = min(int(vmem_cap * 0.9), max(needed, 16 << 20))

        grid_spec = pltpu.PrefetchScalarGridSpec(
            num_scalar_prefetch=0,
            grid=(nt,),
            in_specs=[
                pl.BlockSpec((tb, Dp), lambda t: (t, 0)),    # x tile
                pl.BlockSpec((tb, Dp), lambda t: (t, 0)),    # gathered center rows
            ],
            out_specs=pl.BlockSpec((1, 128), lambda t: (t, 0)),
        )
        partials = pl.pallas_call(
            functools.partial(_pregathered_kernel, true_b=B, tile_b=tb),
            out_shape=jax.ShapeDtypeStruct((nt, 128), jnp.float32),
            grid_spec=grid_spec,
            compiler_params=pltpu.CompilerParams(
                dimension_semantics=("parallel",),
                vmem_limit_bytes=vmem_limit),
        )(x, c_sel)

    return jnp.sum(partials[:, 0]) / jnp.float32(B)


if __name__ == "__main__":
    num_classes = 2
    feat_dim = 128
    batch = 8

    key = jax.random.PRNGKey(0)
    k_x, k_c, k_l = jax.random.split(key, 3)

    # Deterministic synthetic parameters (mirrors torch.randn(num_classes, feat_dim)).
    centers = jax.random.normal(k_c, (num_classes, feat_dim), dtype=jnp.float32)
    x = jax.random.normal(k_x, (batch, feat_dim), dtype=jnp.float32)
    labels = jax.random.randint(k_l, (batch,), 0, num_classes, dtype=jnp.int32)

    loss = center_loss(x, labels, centers)
    jax.block_until_ready(loss)

    # Pure-JAX reference using the PyTorch expansion ||x||^2 + ||c||^2 - 2<x,c>,
    # gathered at the label column (elementwise, no matmul-precision surprises).
    c_sel = centers[labels]                                   # (B, D)
    ref_dist = (jnp.sum(x * x, axis=1) + jnp.sum(c_sel * c_sel, axis=1)
                - 2.0 * jnp.sum(x * c_sel, axis=1))
    ref = jnp.mean(jnp.clip(ref_dist, 1e-12, 1e12))
    assert jnp.allclose(loss, ref, rtol=1e-4, atol=1e-4), (loss, ref)

    print("KERNEL_OK")
</pallas_src>

<mosaic_0001>
module attributes {stable_mosaic.version = 11 : i64} {
  func.func @_resident_kernel(%arg0: i32, %arg1: memref<8x1xi32, #tpu.memory_space<vmem>>, %arg2: memref<8x128xf32, #tpu.memory_space<vmem>>, %arg3: memref<128x128xf32, #tpu.memory_space<vmem>>, %arg4: memref<1x128xf32, #tpu.memory_space<vmem>>) attributes {dimension_semantics = [#tpu.dimension_semantics<parallel>], iteration_bounds = array<i64: 1>, scalar_prefetch = 0 : i64, scratch_operands = 0 : i64, tpu.core_type = #tpu.core_type<tc>, window_params = [{transform_indices = @transform_0, window_bounds = array<i64: 8, 1>}, {transform_indices = @transform_1, window_bounds = array<i64: 8, 128>}, {pipeline_mode = #tpu.pipeline_mode<synchronous>, transform_indices = @transform_2, window_bounds = array<i64: 128, 128>}, {transform_indices = @transform_3, window_bounds = array<i64: 1, 128>}]} {
    %c0 = arith.constant 0 : index
    %c0_0 = arith.constant 0 : index
    %0 = vector.load %arg2[%c0, %c0_0] : memref<8x128xf32, #tpu.memory_space<vmem>>, vector<8x128xf32>
    %c0_1 = arith.constant 0 : index
    %c0_2 = arith.constant 0 : index
    %1 = vector.load %arg1[%c0_1, %c0_2] : memref<8x1xi32, #tpu.memory_space<vmem>>, vector<8x1xi32>
    %2 = tpu.iota {dimensions = array<i32: 1>} : vector<8x128xi32>
    %3 = vector.broadcast %1 : vector<8x1xi32> to vector<8x128xi32>
    %4 = arith.cmpi eq, %3, %2 : vector<8x128xi32>
    %5 = arith.extui %4 : vector<8x128xi1> to vector<8x128xi32>
    %6 = arith.sitofp %5 : vector<8x128xi32> to vector<8x128xf32>
    %c0_3 = arith.constant 0 : index
    %c0_4 = arith.constant 0 : index
    %7 = vector.load %arg3[%c0_3, %c0_4] : memref<128x128xf32, #tpu.memory_space<vmem>>, vector<128x128xf32>
    %cst = arith.constant dense<0.000000e+00> : vector<8x128xf32>
    %8 = tpu.matmul %6, %7, %cst {dimension_numbers = #tpu.dot_dimension_numbers<[1], [0], [0], [1], [0, 0, 1, 1], [], []>} : vector<8x128xf32>, vector<128x128xf32>, vector<8x128xf32> -> vector<8x128xf32>
    %9 = arith.subf %0, %8 : vector<8x128xf32>
    %10 = arith.mulf %9, %9 : vector<8x128xf32>
    %cst_5 = arith.constant dense<0.000000e+00> : vector<8xf32>
    %11 = vector.multi_reduction <add>, %10, %cst_5 [1] : vector<8x128xf32> to vector<8xf32>
    %12 = vector.shape_cast %11 : vector<8xf32> to vector<8x1xf32>
    %cst_6 = arith.constant 9.99999996E-13 : f32
    %cst_7 = arith.constant 9.99999995E+11 : f32
    %13 = vector.broadcast %cst_6 : f32 to vector<8x1xf32>
    %14 = arith.maximumf %13, %12 : vector<8x1xf32>
    %15 = vector.broadcast %cst_7 : f32 to vector<8x1xf32>
    %16 = arith.minimumf %15, %14 : vector<8x1xf32>
    %17 = vector.shape_cast %16 : vector<8x1xf32> to vector<1x8x1xf32>
    %cst_8 = arith.constant dense<0.000000e+00> : vector<1xf32>
    %18 = vector.multi_reduction <add>, %17, %cst_8 [1, 2] : vector<1x8x1xf32> to vector<1xf32>
    %19 = vector.shape_cast %18 : vector<1xf32> to vector<1x1x1xf32>
    %20 = vector.extract %19[0, 0, 0] : f32 from vector<1x1x1xf32>
    %21 = vector.broadcast %20 : f32 to vector<1x128xf32>
    %c0_9 = arith.constant 0 : index
    %c0_10 = arith.constant 0 : index
    %22 = vector.load %arg4[%c0_9, %c0_10] : memref<1x128xf32, #tpu.memory_space<vmem>>, vector<1x128xf32>
    tpu.vector_store %arg4[%c0_9, %c0_10], %21 {strides = array<i32>} : memref<1x128xf32, #tpu.memory_space<vmem>>, vector<1x128xf32>,
    return
  }
  func.func @transform_0(%arg0: i32) -> (i32, i32) {
    %c0_i32 = arith.constant 0 : i32
    %c0_i32_0 = arith.constant 0 : i32
    return %arg0, %c0_i32 : i32, i32
  }
  func.func @transform_1(%arg0: i32) -> (i32, i32) {
    %c0_i32 = arith.constant 0 : i32
    %c0_i32_0 = arith.constant 0 : i32
    return %arg0, %c0_i32 : i32, i32
  }
  func.func @transform_2(%arg0: i32) -> (i32, i32) {
    %c0_i32 = arith.constant 0 : i32
    %c0_i32_0 = arith.constant 0 : i32
    %c0_i32_1 = arith.constant 0 : i32
    return %c0_i32, %c0_i32_0 : i32, i32
  }
  func.func @transform_3(%arg0: i32) -> (i32, i32) {
    %c0_i32 = arith.constant 0 : i32
    %c0_i32_0 = arith.constant 0 : i32
    return %arg0, %c0_i32 : i32, i32
  }
}

</mosaic_0001>

<llo_original>
// kernel: tpu_custom_call.1
$region0: #{tpu_custom_call.1}
  #allocation0 [shape = 'u32[]', space=smem, size = 0x4, offset = 0x4, fixed_abs, tag = 'smem constant byte address 0x4 - core index']
  #allocation1 [shape = 'u32[72,128]{1,0:T(1,128)}', space=vmem, size = 0x9000, scoped, tag = 'internal scratch']
  %s0 = inlined_call_operand.vmem [shape: s32[8,1], index: 0, kind: input, shape index: {}]
  %s1 = inlined_call_operand.vmem [shape: f32[8,128], index: 1, kind: input, shape index: {}]
  %s2 = inlined_call_operand.hbm [shape: f32[128,128], index: 2, kind: input, shape index: {}]
  %s3 = inlined_call_operand.hbm [shape: f32[1,128], index: 3, kind: output, shape index: {}]
  %s4 = sld [smem:[#allocation0]]
  $region26: #{tpu_custom_call.1} parent=0
    _
  %s6 = ssub.s32 1, %s4
  %s7 = scalar_select 0, %s6, %s4
  $region1: #{tpu_custom_call.1} parent=0
    #allocation2 [shape = 'u8[65536]{0}', space=vmem, size = 0x10000, scoped, tag = 'input window, operand 2, single buffered']
    #allocation3 [shape = 's32[1]{0}', space=sflag, size = 0x4, scoped, tag = 'scoped memory for tpu_custom_call.1']
    #allocation4 [shape = 's32[1]{0}', space=sflag, size = 0x4, scoped, tag = 'scoped memory for tpu_custom_call.1']
    #allocation5 [shape = 'u8[512]{0}', space=vmem, size = 0x400, scoped, tag = 'output window, operand 0, single buffered']
    %8 = vsyncpa [#allocation3], 0
    %9 = vsyncpa [#allocation4], 0
    // Predicated region
    $region2: #{tpu_custom_call.1} parent=1 // pred_check
      _
    $region3: #{tpu_custom_call.1} parent=1 // pred_check_branch
      %11 = sbr.rel (0) target = $region5
    $region4: #{tpu_custom_call.1} parent=1 // pred_region
      _
    $region5: #{tpu_custom_call.1} parent=1 // pred_fallthru
      _
    // Predicated region
    $region6: #{tpu_custom_call.1} parent=1 // pred_check
      _
    $region7: #{tpu_custom_call.1} parent=1 // pred_check_branch
      %13 = sbr.rel (0) target = $region9
    $region8: #{tpu_custom_call.1} parent=1 // pred_region
      _
    $region9: #{tpu_custom_call.1} parent=1 // pred_fallthru
      _
    // Predicated region
    $region10: #{tpu_custom_call.1} parent=1 // pred_check
      _
    $region11: #{tpu_custom_call.1} parent=1 // pred_check_branch
      %15 = sbr.rel (0) target = $region13
    $region12: #{tpu_custom_call.1} parent=1 // pred_region
      %17 = vsyncadd [#allocation3], 0
      %s18 = sshll.u32 %s2, 4
      %s19 = int_to_ptr.hbm [resolvable:$true] %s18
      %s20 = sshll.u32 [#allocation2], 4
      %s21 = int_to_ptr.vmem [resolvable:$true] %s20
      %26 = dma.hbm_to_vmem [thread:$0]  %s19, 2048, %s21, [#allocation3], 128, 128, 8
    $region13: #{tpu_custom_call.1} parent=1 // pred_fallthru
      _
    // Predicated region
    $region14: #{tpu_custom_call.1} parent=1 // pred_check
      _
    $region15: #{tpu_custom_call.1} parent=1 // pred_check_branch
      %28 = sbr.rel (0) target = $region17
    $region16: #{tpu_custom_call.1} parent=1 // pred_region
      %30 = dma.done [#allocation3], 2048
    $region17: #{tpu_custom_call.1} parent=1 // pred_fallthru
      _
    %v31 = vld [vmem:[%s1] sm:$0xff]
    %v32 = vld [vmem:[%s0] sm:$0xff]
    %v33 = vlaneseq
    %v34 = vand.u32 %v33, 127
    %35 = vset.pattern.permute.xlu0 0
    %36 = vperm.xlu0 %35, %v32
    %v37 = vpop.permute.xlu0 %36
    %vm38 = vcmp.eq.s32.totalorder %v37, %v34
    %v39 = vsel %vm38, 1, 0
    %v40 = vcvt.s32.f32 %v39
    %v41 = vld [vmem:[#allocation2] sm:$0xff]
    %v42 = vld [vmem:[#allocation2 + $0x8] sm:$0xff]
    %v43 = vld [vmem:[#allocation2 + $0x10] sm:$0xff]
    %v44 = vld [vmem:[#allocation2 + $0x18] sm:$0xff]
    %v45 = vld [vmem:[#allocation2 + $0x20] sm:$0xff]
    %v46 = vld [vmem:[#allocation2 + $0x28] sm:$0xff]
    %v47 = vld [vmem:[#allocation2 + $0x30] sm:$0xff]
    %v48 = vld [vmem:[#allocation2 + $0x38] sm:$0xff]
    %v49 = vld [vmem:[#allocation2 + $0x40] sm:$0xff]
    %v50 = vld [vmem:[#allocation2 + $0x48] sm:$0xff]
    %v51 = vld [vmem:[#allocation2 + $0x50] sm:$0xff]
    %v52 = vld [vmem:[#allocation2 + $0x58] sm:$0xff]
    %v53 = vld [vmem:[#allocation2 + $0x60] sm:$0xff]
    %v54 = vld [vmem:[#allocation2 + $0x68] sm:$0xff]
    %v55 = vld [vmem:[#allocation2 + $0x70] sm:$0xff]
    %v56 = vld [vmem:[#allocation2 + $0x78] sm:$0xff]
    %57 = vmatpush.msra.mxu0 %v56
    %58 = vmatpush.msra.mxu0 %v55
    %59 = vmatpush.msra.mxu0 %v54
    %60 = vmatpush.msra.mxu0 %v53
    %61 = vmatpush.msra.mxu0 %v52
    %62 = vmatpush.msra.mxu0 %v51
    %63 = vmatpush.msra.mxu0 %v50
    %64 = vmatpush.msra.mxu0 %v49
    %65 = vmatpush.msra.mxu0 %v48
    %66 = vmatpush.msra.mxu0 %v47
    %67 = vmatpush.msra.mxu0 %v46
    %68 = vmatpush.msra.mxu0 %v45
    %69 = vmatpush.msra.mxu0 %v44
    %70 = vmatpush.msra.mxu0 %v43
    %71 = vmatpush.msra.mxu0 %v42
    %72 = vmatpush.msra.mxu0 %v41
    %73 = vmatmul.f32.gmra.mxu0 %v40
    %v74 = vpop.f32.mrf.mxu0
    %v75 = vadd.f32 0.0, %v74
    %76 = vdwg.mxu0
    %v77 = vsub.f32 %v31, %v75
    %v78 = vmul.f32 %v77, %v77
    %79 = vadd.xlane.f32.xlu0 %v78
    %v80 = vpop.xlane.xlu0 %79
    %v81 = vmax.f32 %v80, 1e-12
    %v82 = vmin.f32 %v81, 1e+12
    %vm83 = vcmask 7168
    %v84 = vsel %vm83, %v82, 0.0
    %85 = vadd.xlane.f32.xlu0 %v84
    %v86 = vpop.xlane.xlu0 %85
    %v87 = vrot.slane %v86, 4
    %v88 = vadd.f32 %v86, %v87
    %v89 = vrot.slane %v88, 2
    %v90 = vadd.f32 %v88, %v89
    %v91 = vrot.slane %v90, 1
    %v92 = vadd.f32 %v90, %v91
    %s93 = vtos %v92
    %v94 = vstv %s93
    %95 = vst [vmem:[#allocation5] sm:$0x1] %v94
    // Predicated region
    $region18: #{tpu_custom_call.1} parent=1 // pred_check
      _
    $region19: #{tpu_custom_call.1} parent=1 // pred_check_branch
      %97 = sbr.rel (0) target = $region21
    $region20: #{tpu_custom_call.1} parent=1 // pred_region
      %99 = vsyncadd [#allocation4], 0
      %s101 = sshll.u32 [#allocation5], 4
      %s102 = int_to_ptr.vmem [resolvable:$true] %s101
      %s103 = sshll.u32 %s3, 4
      %s104 = int_to_ptr.hbm [resolvable:$true] %s103
      %106 = dma.vmem_to_hbm [thread:$0]  %s102, 16, %s104, [#allocation4]
    $region21: #{tpu_custom_call.1} parent=1 // pred_fallthru
      _
    // Predicated region
    $region22: #{tpu_custom_call.1} parent=1 // pred_check
      _
    $region23: #{tpu_custom_call.1} parent=1 // pred_check_branch
      %108 = sbr.rel (0) target = $region25
    $region24: #{tpu_custom_call.1} parent=1 // pred_region
      %110 = dma.done [#allocation4], 16
    $region25: #{tpu_custom_call.1} parent=1 // pred_fallthru
      _
    %111 = vsyncpa [#allocation3], 1
    %112 = vsyncpa [#allocation4], 1

</llo_original>
